<compile_context>
chip_gen: v6e
topology: v6e:2x2x1
jax: 0.10.0
libtpu: 0.0.40
codegen_flags: <defaults>
</compile_context>

<pallas_src>
import functools
import math

import jax
import jax.numpy as jnp
from jax.experimental import pallas as pl
from jax.experimental.pallas import tpu as pltpu


# ----------------------------- Pallas kernel ------------------------------- #

def _fused_forward_kernel(num_layers, gate_pitch,
                          x_ref, w0_ref, w_rest_ref, b_all_ref,
                          fc_w_ref, fc_b_ref, out_ref):
    """Fused forward: num_layers LSTM cells (zero init state, seq_len==1) + FC.

    Shapes (GP = gate_pitch = 128-lane multiple >= H, layers packed gate-major):
      x_ref      (B_pad, input_size)            f32
      w0_ref     (input_size, 3*GP)             bf16   gates [i, g, o] lane slabs
      w_rest_ref (max(L-1,1), GP, 3*GP)         bf16
      b_all_ref  (L, 1, 3*GP)                   f32
      fc_w_ref   (GP, O_pad)                    bf16
      fc_b_ref   (1, O_pad)                     f32
      out_ref    (B_pad, O_pad)                 f32
    """
    GP = gate_pitch

    def cell(h, w_bf16, b):
        # Single fused MXU matmul for all three live gates (bf16 in, f32 acc),
        # one fused bias add, then lane-aligned static slices.
        z = jnp.dot(h.astype(jnp.bfloat16), w_bf16,
                    preferred_element_type=jnp.float32) + b
        i_gate = jax.nn.sigmoid(z[:, 0:GP])
        g_gate = jnp.tanh(z[:, GP:2 * GP])
        o_gate = jax.nn.sigmoid(z[:, 2 * GP:3 * GP])
        # f * c0 == 0 and the W_hh term == 0 because h0 = c0 = 0, seq_len == 1.
        # Padded lanes: z=0 -> g=0 -> h=0, so padding stays inert layer to layer.
        return o_gate * jnp.tanh(i_gate * g_gate)          # (B_pad, GP) f32

    h = cell(x_ref[...], w0_ref[...], b_all_ref[0])
    for layer in range(1, num_layers):
        h = cell(h, w_rest_ref[layer - 1], b_all_ref[layer])

    out_ref[...] = (jnp.dot(h.astype(jnp.bfloat16), fc_w_ref[...],
                            preferred_element_type=jnp.float32)
                    + fc_b_ref[...])                        # lane-dense store


# ------------------------- Parameter initialization ------------------------ #

def init_params(key, input_size, hidden_dim, output_size, num_layers):
    """nn.LSTM / nn.Linear-style init (U(-1/sqrt(H), 1/sqrt(H))).

    Returns:
      raw:    f32 PyTorch-layout parameters (for the independent reference).
      packed: kernel operands, packed/padded ONCE here (bf16 weights, fused
              gate slabs, lane-padded FC), so the jitted forward does no
              weight-side padding work per call.
    """
    H = hidden_dim
    GP = pl.cdiv(H, 128) * 128
    O_pad = pl.cdiv(output_size, 128) * 128
    k = 1.0 / math.sqrt(float(H))
    # PyTorch gate order along the 4H axis is [i, f, g, o]; f is dead (c0 == 0).
    gate_slices = (slice(0, H), slice(2 * H, 3 * H), slice(3 * H, 4 * H))

    raw = {"lstm": []}
    w0_pack = None
    w_rest = []
    b_all = []
    for layer in range(num_layers):
        in_dim = input_size if layer == 0 else H
        key, k1, k2, k3, k4 = jax.random.split(key, 5)
        w_ih = jax.random.uniform(k1, (4 * H, in_dim), jnp.float32, -k, k)
        w_hh = jax.random.uniform(k2, (4 * H, H), jnp.float32, -k, k)
        b_ih = jax.random.uniform(k3, (4 * H,), jnp.float32, -k, k)
        b_hh = jax.random.uniform(k4, (4 * H,), jnp.float32, -k, k)
        raw["lstm"].append({"w_ih": w_ih, "w_hh": w_hh, "b_ih": b_ih, "b_hh": b_hh})

        b = b_ih + b_hh
        K_pad = in_dim if layer == 0 else GP
        w_pack = jnp.zeros((K_pad, 3 * GP), jnp.float32)
        b_pack = jnp.zeros((1, 3 * GP), jnp.float32)
        for gidx, s in enumerate(gate_slices):
            w_pack = w_pack.at[:in_dim, gidx * GP:gidx * GP + H].set(w_ih[s].T)
            b_pack = b_pack.at[0, gidx * GP:gidx * GP + H].set(b[s])
        if layer == 0:
            w0_pack = w_pack.astype(jnp.bfloat16)
        else:
            w_rest.append(w_pack.astype(jnp.bfloat16))
        b_all.append(b_pack)

    key, k5, k6 = jax.random.split(key, 3)
    fc_w = jax.random.uniform(k5, (output_size, H), jnp.float32, -k, k)
    fc_b = jax.random.uniform(k6, (output_size,), jnp.float32, -k, k)
    raw["fc_w"], raw["fc_b"] = fc_w, fc_b

    fc_w_pack = (jnp.zeros((GP, O_pad), jnp.float32)
                 .at[:H, :output_size].set(fc_w.T).astype(jnp.bfloat16))
    fc_b_pack = jnp.zeros((1, O_pad), jnp.float32).at[0, :output_size].set(fc_b)

    packed = {
        "w0": w0_pack,                                            # (in0, 3*GP) bf16
        "w_rest": (jnp.stack(w_rest) if w_rest
                   else jnp.zeros((1, GP, 3 * GP), jnp.bfloat16)),  # (L-1, GP, 3*GP)
        "b_all": jnp.stack(b_all),                                # (L, 1, 3*GP) f32
        "fc_w": fc_w_pack,                                        # (GP, O_pad) bf16
        "fc_b": fc_b_pack,                                        # (1, O_pad) f32
    }
    return raw, packed


# --------------------------------- Forward --------------------------------- #

@functools.partial(jax.jit, static_argnames=("num_layers", "hidden_dim", "output_size"))
def lstm_forward(packed, x, *, num_layers, hidden_dim, output_size):
    # x: (B, input_size). PyTorch does x.unsqueeze(1) -> sequence length 1, so
    # each stacked layer runs exactly one cell step with zero initial state.
    # GaussianNoise is identity in eval mode.
    # TODO(synk): training-mode Gaussian noise (torch.randn_like * 0.1) not implemented.
    B, _D = x.shape
    GP = pl.cdiv(hidden_dim, 128) * 128
    O_pad = pl.cdiv(output_size, 128) * 128
    B_pad = pl.cdiv(B, 8) * 8                     # sublane-multiple batch

    x_p = jnp.pad(x, ((0, B_pad - B), (0, 0)))    # only per-call pad left: activations

    vmem = pl.BlockSpec(memory_space=pltpu.MemorySpace.VMEM)
    out_p = pl.pallas_call(
        functools.partial(_fused_forward_kernel, num_layers, GP),
        out_shape=jax.ShapeDtypeStruct((B_pad, O_pad), jnp.float32),
        in_specs=[vmem] * 6,
        out_specs=vmem,
        compiler_params=pltpu.CompilerParams(vmem_limit_bytes=32 * 1024 * 1024),
    )(x_p, packed["w0"], packed["w_rest"], packed["b_all"],
      packed["fc_w"], packed["fc_b"])

    out = out_p[:B, :output_size]
    return jnp.squeeze(out)                       # matches torch .squeeze()


# ---------------- Independent pure-JAX reference (full LSTM math) ----------- #

def _reference_forward(raw, x, num_layers, hidden_dim, output_size):
    """Full f32 LSTM cell (incl. W_hh and forget gate) in PyTorch layout/order."""
    B = x.shape[0]
    H = hidden_dim
    h_in = x
    for layer in range(num_layers):
        p = raw["lstm"][layer]
        h0 = jnp.zeros((B, H), jnp.float32)
        c0 = jnp.zeros((B, H), jnp.float32)
        gates = (h_in @ p["w_ih"].T + p["b_ih"] + h0 @ p["w_hh"].T + p["b_hh"])
        i = jax.nn.sigmoid(gates[:, 0:H])
        f = jax.nn.sigmoid(gates[:, H:2 * H])
        g = jnp.tanh(gates[:, 2 * H:3 * H])
        o = jax.nn.sigmoid(gates[:, 3 * H:4 * H])
        c = f * c0 + i * g
        h_in = o * jnp.tanh(c)
    out = h_in @ raw["fc_w"].T + raw["fc_b"]
    return jnp.squeeze(out)


# ----------------------------------- Main ----------------------------------- #

if __name__ == "__main__":
    B = 4
    INPUT_SIZE = 16
    HIDDEN_DIM = 32
    OUTPUT_SIZE = 8
    NUM_LAYERS = 2

    key = jax.random.PRNGKey(0)
    key, xkey, pkey = jax.random.split(key, 3)
    x = jax.random.normal(xkey, (B, INPUT_SIZE), dtype=jnp.float32)
    raw, packed = init_params(pkey, INPUT_SIZE, HIDDEN_DIM, OUTPUT_SIZE, NUM_LAYERS)

    out = lstm_forward(packed, x, num_layers=NUM_LAYERS,
                       hidden_dim=HIDDEN_DIM, output_size=OUTPUT_SIZE)
    jax.block_until_ready(out)

    assert out.shape == (B, OUTPUT_SIZE), out.shape
    assert jnp.all(jnp.isfinite(out))

    # Independent check against full-fidelity f32 LSTM math (kernel streams
    # bf16 weights, hence the loosened tolerance).
    ref = _reference_forward(raw, x, NUM_LAYERS, HIDDEN_DIM, OUTPUT_SIZE)
    assert jnp.allclose(out, ref, atol=2e-2, rtol=2e-2), jnp.max(jnp.abs(out - ref))

    print("KERNEL_OK")
</pallas_src>

<mosaic_0001>
module attributes {stable_mosaic.version = 11 : i64} {
  func.func @_fused_forward_kernel(%arg0: memref<8x16xf32, #tpu.memory_space<vmem>>, %arg1: memref<16x384xbf16, #tpu.memory_space<vmem>>, %arg2: memref<1x128x384xbf16, #tpu.memory_space<vmem>>, %arg3: memref<2x1x384xf32, #tpu.memory_space<vmem>>, %arg4: memref<128x128xbf16, #tpu.memory_space<vmem>>, %arg5: memref<1x128xf32, #tpu.memory_space<vmem>>, %arg6: memref<8x128xf32, #tpu.memory_space<vmem>>) attributes {dimension_semantics = [], scalar_prefetch = 0 : i64, scratch_operands = 0 : i64, tpu.core_type = #tpu.core_type<tc>} {
    %c0 = arith.constant 0 : index
    %c0_0 = arith.constant 0 : index
    %0 = vector.load %arg0[%c0, %c0_0] : memref<8x16xf32, #tpu.memory_space<vmem>>, vector<8x16xf32>
    %c0_1 = arith.constant 0 : index
    %c0_2 = arith.constant 0 : index
    %1 = vector.load %arg1[%c0_1, %c0_2] : memref<16x384xbf16, #tpu.memory_space<vmem>>, vector<16x384xbf16>
    %c0_3 = arith.constant 0 : index
    %c0_4 = arith.constant 0 : index
    %c0_5 = arith.constant 0 : index
    %2 = vector.load %arg3[%c0_3, %c0_4, %c0_5] : memref<2x1x384xf32, #tpu.memory_space<vmem>>, vector<1x1x384xf32>
    %3 = vector.shape_cast %2 : vector<1x1x384xf32> to vector<1x384xf32>
    %4 = arith.truncf %0 : vector<8x16xf32> to vector<8x16xbf16>
    %cst = arith.constant dense<0.000000e+00> : vector<8x384xf32>
    %5 = tpu.matmul %4, %1, %cst {dimension_numbers = #tpu.dot_dimension_numbers<[1], [0], [0], [1], [0, 0, 1, 1], [], []>} : vector<8x16xbf16>, vector<16x384xbf16>, vector<8x384xf32> -> vector<8x384xf32>
    %6 = vector.broadcast %3 : vector<1x384xf32> to vector<8x384xf32>
    %7 = arith.addf %5, %6 : vector<8x384xf32>
    %8 = vector.extract_strided_slice %7 {offsets = [0, 0], sizes = [8, 128], strides = [1, 1]} : vector<8x384xf32> to vector<8x128xf32>
    %9 = arith.negf %8 : vector<8x128xf32>
    %10 = math.exp %9 : vector<8x128xf32>
    %cst_6 = arith.constant 1.000000e+00 : f32
    %11 = vector.broadcast %cst_6 : f32 to vector<8x128xf32>
    %12 = arith.addf %11, %10 : vector<8x128xf32>
    %13 = arith.divf %11, %12 : vector<8x128xf32>
    %14 = vector.extract_strided_slice %7 {offsets = [0, 128], sizes = [8, 128], strides = [1, 1]} : vector<8x384xf32> to vector<8x128xf32>
    %15 = math.tanh %14 : vector<8x128xf32>
    %16 = vector.extract_strided_slice %7 {offsets = [0, 256], sizes = [8, 128], strides = [1, 1]} : vector<8x384xf32> to vector<8x128xf32>
    %17 = arith.negf %16 : vector<8x128xf32>
    %18 = math.exp %17 : vector<8x128xf32>
    %cst_7 = arith.constant 1.000000e+00 : f32
    %19 = vector.broadcast %cst_7 : f32 to vector<8x128xf32>
    %20 = arith.addf %19, %18 : vector<8x128xf32>
    %21 = arith.divf %19, %20 : vector<8x128xf32>
    %22 = arith.mulf %13, %15 : vector<8x128xf32>
    %23 = math.tanh %22 : vector<8x128xf32>
    %24 = arith.mulf %21, %23 : vector<8x128xf32>
    %c0_8 = arith.constant 0 : index
    %c0_9 = arith.constant 0 : index
    %c0_10 = arith.constant 0 : index
    %25 = vector.load %arg2[%c0_8, %c0_9, %c0_10] : memref<1x128x384xbf16, #tpu.memory_space<vmem>>, vector<1x128x384xbf16>
    %26 = vector.shape_cast %25 : vector<1x128x384xbf16> to vector<128x384xbf16>
    %c1 = arith.constant 1 : index
    %c0_11 = arith.constant 0 : index
    %c0_12 = arith.constant 0 : index
    %27 = vector.load %arg3[%c1, %c0_11, %c0_12] : memref<2x1x384xf32, #tpu.memory_space<vmem>>, vector<1x1x384xf32>
    %28 = vector.shape_cast %27 : vector<1x1x384xf32> to vector<1x384xf32>
    %29 = arith.truncf %24 : vector<8x128xf32> to vector<8x128xbf16>
    %cst_13 = arith.constant dense<0.000000e+00> : vector<8x384xf32>
    %30 = tpu.matmul %29, %26, %cst_13 {dimension_numbers = #tpu.dot_dimension_numbers<[1], [0], [0], [1], [0, 0, 1, 1], [], []>} : vector<8x128xbf16>, vector<128x384xbf16>, vector<8x384xf32> -> vector<8x384xf32>
    %31 = vector.broadcast %28 : vector<1x384xf32> to vector<8x384xf32>
    %32 = arith.addf %30, %31 : vector<8x384xf32>
    %33 = vector.extract_strided_slice %32 {offsets = [0, 0], sizes = [8, 128], strides = [1, 1]} : vector<8x384xf32> to vector<8x128xf32>
    %34 = arith.negf %33 : vector<8x128xf32>
    %35 = math.exp %34 : vector<8x128xf32>
    %cst_14 = arith.constant 1.000000e+00 : f32
    %36 = vector.broadcast %cst_14 : f32 to vector<8x128xf32>
    %37 = arith.addf %36, %35 : vector<8x128xf32>
    %38 = arith.divf %36, %37 : vector<8x128xf32>
    %39 = vector.extract_strided_slice %32 {offsets = [0, 128], sizes = [8, 128], strides = [1, 1]} : vector<8x384xf32> to vector<8x128xf32>
    %40 = math.tanh %39 : vector<8x128xf32>
    %41 = vector.extract_strided_slice %32 {offsets = [0, 256], sizes = [8, 128], strides = [1, 1]} : vector<8x384xf32> to vector<8x128xf32>
    %42 = arith.negf %41 : vector<8x128xf32>
    %43 = math.exp %42 : vector<8x128xf32>
    %cst_15 = arith.constant 1.000000e+00 : f32
    %44 = vector.broadcast %cst_15 : f32 to vector<8x128xf32>
    %45 = arith.addf %44, %43 : vector<8x128xf32>
    %46 = arith.divf %44, %45 : vector<8x128xf32>
    %47 = arith.mulf %38, %40 : vector<8x128xf32>
    %48 = math.tanh %47 : vector<8x128xf32>
    %49 = arith.mulf %46, %48 : vector<8x128xf32>
    %50 = arith.truncf %49 : vector<8x128xf32> to vector<8x128xbf16>
    %c0_16 = arith.constant 0 : index
    %c0_17 = arith.constant 0 : index
    %51 = vector.load %arg4[%c0_16, %c0_17] : memref<128x128xbf16, #tpu.memory_space<vmem>>, vector<128x128xbf16>
    %cst_18 = arith.constant dense<0.000000e+00> : vector<8x128xf32>
    %52 = tpu.matmul %50, %51, %cst_18 {dimension_numbers = #tpu.dot_dimension_numbers<[1], [0], [0], [1], [0, 0, 1, 1], [], []>} : vector<8x128xbf16>, vector<128x128xbf16>, vector<8x128xf32> -> vector<8x128xf32>
    %c0_19 = arith.constant 0 : index
    %c0_20 = arith.constant 0 : index
    %53 = vector.load %arg5[%c0_19, %c0_20] : memref<1x128xf32, #tpu.memory_space<vmem>>, vector<1x128xf32>
    %54 = vector.broadcast %53 : vector<1x128xf32> to vector<8x128xf32>
    %55 = arith.addf %52, %54 : vector<8x128xf32>
    %c0_21 = arith.constant 0 : index
    %c0_22 = arith.constant 0 : index
    %56 = vector.load %arg6[%c0_21, %c0_22] : memref<8x128xf32, #tpu.memory_space<vmem>>, vector<8x128xf32>
    tpu.vector_store %arg6[%c0_21, %c0_22], %55 {strides = array<i32>} : memref<8x128xf32, #tpu.memory_space<vmem>>, vector<8x128xf32>,
    return
  }
}

</mosaic_0001>

<llo_original>
// kernel: lstm_forward.1
$region0: #{lstm_forward.1}
  #allocation0 [shape = 'u32[]', space=smem, size = 0x4, offset = 0x4, fixed_abs, tag = 'smem constant byte address 0x4 - core index']
  #allocation1 [shape = 'u32[144,128]{1,0:T(1,128)}', space=vmem, size = 0x12000, scoped, tag = 'internal scratch']
  %s0 = inlined_call_operand.vmem [shape: f32[8,16], index: 0, kind: input, shape index: {}]
  %s1 = inlined_call_operand.hbm [shape: bf16[16,384], index: 1, kind: input, shape index: {}]
  %s2 = inlined_call_operand.hbm [shape: bf16[1,128,384], index: 2, kind: input, shape index: {}]
  %s3 = inlined_call_operand.vmem [shape: f32[2,1,384], index: 3, kind: input, shape index: {}]
  %s4 = inlined_call_operand.hbm [shape: bf16[128,128], index: 4, kind: input, shape index: {}]
  %s5 = inlined_call_operand.vmem [shape: f32[1,128], index: 5, kind: input, shape index: {}]
  %s6 = inlined_call_operand.vmem [shape: f32[8,128], index: 6, kind: output, shape index: {}]
  %s7 = sld [smem:[#allocation0]]
  $region46: #{lstm_forward.1} parent=0
    _
  %s9 = ssub.s32 1, %s7
  %s10 = scalar_select 0, %s9, %s7
  $region1: #{lstm_forward.1} parent=0
    #allocation2 [shape = 'u8[12288]{0}', space=vmem, size = 0x3000, scoped, tag = 'input window, operand 1, single buffered']
    #allocation3 [shape = 's32[1]{0}', space=sflag, size = 0x4, scoped, tag = 'scoped memory for lstm_forward.1']
    #allocation4 [shape = 'u8[98304]{0}', space=vmem, size = 0x18000, scoped, tag = 'input window, operand 2, single buffered']
    #allocation5 [shape = 's32[1]{0}', space=sflag, size = 0x4, scoped, tag = 'scoped memory for lstm_forward.1']
    #allocation6 [shape = 'u8[32768]{0}', space=vmem, size = 0x8000, scoped, tag = 'input window, operand 4, single buffered']
    %11 = vsyncpa [#allocation3], 0
    %12 = vsyncpa [#allocation5], 0
    // Predicated region
    $region2: #{lstm_forward.1} parent=1 // pred_check
      _
    $region3: #{lstm_forward.1} parent=1 // pred_check_branch
      %14 = sbr.rel (0) target = $region5
    $region4: #{lstm_forward.1} parent=1 // pred_region
      _
    $region5: #{lstm_forward.1} parent=1 // pred_fallthru
      _
    // Predicated region
    $region6: #{lstm_forward.1} parent=1 // pred_check
      _
    $region7: #{lstm_forward.1} parent=1 // pred_check_branch
      %16 = sbr.rel (0) target = $region9
    $region8: #{lstm_forward.1} parent=1 // pred_region
      %s18 = ssub.s32 384, 384
      %19 = vsyncadd [#allocation3], %s18
      %s20 = sshll.u32 [#allocation2], 4
      %s21 = int_to_ptr.vmem [resolvable:$true] %s20
      %26 = dma.hbm_to_vmem [thread:$0]  %s1, 384, %s21, [#allocation3], 192, 192, 12
    $region9: #{lstm_forward.1} parent=1 // pred_fallthru
      _
    // Predicated region
    $region10: #{lstm_forward.1} parent=1 // pred_check
      _
    $region11: #{lstm_forward.1} parent=1 // pred_check_branch
      %28 = sbr.rel (0) target = $region13
    $region12: #{lstm_forward.1} parent=1 // pred_region
      %s30 = ssub.s32 3072, 3072
      %31 = vsyncadd [#allocation5], %s30
      %s32 = sshll.u32 [#allocation4], 4
      %s33 = int_to_ptr.vmem [resolvable:$true] %s32
      %38 = dma.hbm_to_vmem [thread:$0]  %s2, 3072, %s33, [#allocation5], 192, 192, 12
    $region13: #{lstm_forward.1} parent=1 // pred_fallthru
      _
    // Predicated region
    $region14: #{lstm_forward.1} parent=1 // pred_check
      _
    $region15: #{lstm_forward.1} parent=1 // pred_check_branch
      %40 = sbr.rel (0) target = $region17
    $region16: #{lstm_forward.1} parent=1 // pred_region
      _
    $region17: #{lstm_forward.1} parent=1 // pred_fallthru
      _
    // Predicated region
    $region18: #{lstm_forward.1} parent=1 // pred_check
      _
    $region19: #{lstm_forward.1} parent=1 // pred_check_branch
      %42 = sbr.rel (0) target = $region21
    $region20: #{lstm_forward.1} parent=1 // pred_region
      %s44 = ssub.s32 1024, 1024
      %45 = vsyncadd [#allocation5], %s44
      %s46 = sshll.u32 [#allocation6], 4
      %s47 = int_to_ptr.vmem [resolvable:$true] %s46
      %52 = dma.hbm_to_vmem [thread:$0]  %s4, 1024, %s47, [#allocation5], 64, 64, 4
    $region21: #{lstm_forward.1} parent=1 // pred_fallthru
      _
    // Predicated region
    $region22: #{lstm_forward.1} parent=1 // pred_check
      _
    $region23: #{lstm_forward.1} parent=1 // pred_check_branch
      %54 = sbr.rel (0) target = $region25
    $region24: #{lstm_forward.1} parent=1 // pred_region
      _
    $region25: #{lstm_forward.1} parent=1 // pred_fallthru
      _
    // Predicated region
    $region26: #{lstm_forward.1} parent=1 // pred_check
      _
    $region27: #{lstm_forward.1} parent=1 // pred_check_branch
      %56 = sbr.rel (0) target = $region29
    $region28: #{lstm_forward.1} parent=1 // pred_region
      %57 = dma.done [#allocation3], 384
    $region29: #{lstm_forward.1} parent=1 // pred_fallthru
      _
    // Predicated region
    $region30: #{lstm_forward.1} parent=1 // pred_check
      _
    $region31: #{lstm_forward.1} parent=1 // pred_check_branch
      %59 = sbr.rel (0) target = $region33
    $region32: #{lstm_forward.1} parent=1 // pred_region
      %60 = dma.done [#allocation5], 3072
    $region33: #{lstm_forward.1} parent=1 // pred_fallthru
      _
    // Predicated region
    $region34: #{lstm_forward.1} parent=1 // pred_check
      _
    $region35: #{lstm_forward.1} parent=1 // pred_check_branch
      %62 = sbr.rel (0) target = $region37
    $region36: #{lstm_forward.1} parent=1 // pred_region
      %63 = dma.done [#allocation5], 1024
    $region37: #{lstm_forward.1} parent=1 // pred_fallthru
      _
    %v65 = vld [vmem:[%s0] sm:$0xff]
    %v66 = vld [vmem:[#allocation2] sm:$0xff]
    %v67 = vld [vmem:[#allocation2 + $0x8] sm:$0xf]
    %v68 = vld [vmem:[#allocation2 + $0xc] sm:$0xff]
    %v69 = vld [vmem:[#allocation2 + $0x14] sm:$0xf]
    %v70 = vld [vmem:[%s3] sm:$0x7]
    %v71 = vpack.c.bf16 %v65, %v65
    %v73 = vlaneseq
    %v74 = vshrl.u32 %v73, 7
    %v75 = vsub.s32 0, %v74
    %v76 = vrot.slane %v70, %v75
    %v77 = vlaneseq
    %v78 = vshrl.u32 %v77, 7
    %v79 = vsub.s32 1, %v78
    %v80 = vrot.slane %v70, %v79
    %v81 = vlaneseq
    %v82 = vshrl.u32 %v81, 7
    %v83 = vsub.s32 2, %v82
    %v84 = vrot.slane %v70, %v83
    %v92 = vunpack.c.l.b16 %v66
    %v93 = vunpack.c.h.b16 %v66
    %v94 = vunpack.c.l.b16 %v67
    %v95 = vunpack.c.l.b16 %v68
    %v96 = vunpack.c.h.b16 %v68
    %v97 = vunpack.c.l.b16 %v69
    %v98 = vpack.c.b16 %v95, %v92
    %v99 = vpack.c.b16 %v96, %v93
    %v100 = vpack.c.b16 %v97, %v94
    %vm104 = vcmask 130048
    %v106 = vsel %vm104, %v71, 0
    %108 = vmatprep.subr.bf16.mxu0 0
    %109 = vmatpush1.bf16.msra.mxu0 0
    %110 = vmatprep.subr.bf16.mxu0 0
    %111 = vmatpush1.bf16.msra.mxu0 0
    %112 = vmatprep.subr.bf16.mxu0 0
    %113 = vmatpush1.bf16.msra.mxu0 0
    %114 = vmatprep.subr.bf16.mxu0 0
    %115 = vmatpush1.bf16.msra.mxu0 0
    %116 = vmatprep.subr.bf16.mxu0 0
    %117 = vmatpush1.bf16.msra.mxu0 0
    %118 = vmatprep.subr.bf16.mxu0 0
    %119 = vmatpush1.bf16.msra.mxu0 0
    %120 = vmatprep.subr.bf16.mxu0 0
    %121 = vmatpush1.bf16.msra.mxu0 0
    %122 = vmatprep.subr.bf16.mxu0 %v99
    %123 = vmatpush1.bf16.msra.mxu0 %v98
    %124 = vmatprep.subr.bf16.mxu0 0
    %125 = vmatpush2.bf16.msra.mxu0 0
    %126 = vmatprep.subr.bf16.mxu0 0
    %127 = vmatpush2.bf16.msra.mxu0 0
    %128 = vmatprep.subr.bf16.mxu0 0
    %129 = vmatpush2.bf16.msra.mxu0 0
    %130 = vmatprep.subr.bf16.mxu0 0
    %131 = vmatpush2.bf16.msra.mxu0 0
    %132 = vmatprep.subr.bf16.mxu0 0
    %133 = vmatpush2.bf16.msra.mxu0 0
    %134 = vmatprep.subr.bf16.mxu0 0
    %135 = vmatpush2.bf16.msra.mxu0 0
    %136 = vmatprep.subr.bf16.mxu0 0
    %137 = vmatpush2.bf16.msra.mxu0 0
    %138 = vmatprep.subr.bf16.mxu0 0
    %139 = vmatpush2.bf16.msra.mxu0 0
    %140 = vmatprep.mubr.bf16.mxu0 0
    %141 = vmatmul.mubr.bf16.gmra.mxu0 %v106
    %v142 = vpop.f32.mrf.mxu0
    %v143 = vadd.f32 %v76, %v142
    %v144 = vpop.f32.mrf.mxu0
    %v145 = vadd.f32 %v80, %v144
    %v146 = vpop.f32.mrf.mxu0
    %v147 = vpop.f32.mrf.mxu0
    %148 = vdwg.mxu0
    %149 = vmatprep.subr.bf16.mxu0 0
    %150 = vmatpush1.bf16.msra.mxu0 0
    %151 = vmatprep.subr.bf16.mxu0 0
    %152 = vmatpush1.bf16.msra.mxu0 0
    %153 = vmatprep.subr.bf16.mxu0 0
    %154 = vmatpush1.bf16.msra.mxu0 0
    %155 = vmatprep.subr.bf16.mxu0 0
    %156 = vmatpush1.bf16.msra.mxu0 0
    %157 = vmatprep.subr.bf16.mxu0 0
    %158 = vmatpush1.bf16.msra.mxu0 0
    %159 = vmatprep.subr.bf16.mxu0 0
    %160 = vmatpush1.bf16.msra.mxu0 0
    %161 = vmatprep.subr.bf16.mxu0 0
    %162 = vmatpush1.bf16.msra.mxu0 0
    %163 = vmatprep.subr.bf16.mxu0 0
    %164 = vmatpush1.bf16.msra.mxu0 %v100
    %165 = vmatprep.subr.bf16.mxu0 0
    %166 = vmatpush2.bf16.msra.mxu0 0
    %167 = vmatprep.subr.bf16.mxu0 0
    %168 = vmatpush2.bf16.msra.mxu0 0
    %169 = vmatprep.subr.bf16.mxu0 0
    %170 = vmatpush2.bf16.msra.mxu0 0
    %171 = vmatprep.subr.bf16.mxu0 0
    %172 = vmatpush2.bf16.msra.mxu0 0
    %173 = vmatprep.subr.bf16.mxu0 0
    %174 = vmatpush2.bf16.msra.mxu0 0
    %175 = vmatprep.subr.bf16.mxu0 0
    %176 = vmatpush2.bf16.msra.mxu0 0
    %177 = vmatprep.subr.bf16.mxu0 0
    %178 = vmatpush2.bf16.msra.mxu0 0
    %179 = vmatprep.subr.bf16.mxu0 0
    %180 = vmatpush2.bf16.msra.mxu0 0
    %181 = vmatprep.mubr.bf16.mxu0 0
    %182 = vmatmul.mubr.bf16.gmra.mxu0 %v106
    %v183 = vpop.f32.mrf.mxu0
    %v184 = vadd.f32 %v84, %v183
    %v185 = vpop.f32.mrf.mxu0
    %v186 = vpop.f32.mrf.mxu0
    %v187 = vpop.f32.mrf.mxu0
    %188 = vdwg.mxu0
    %v189 = vxor.u32 %v143, 2147483648
    %v190 = vmul.f32 %v189, 1.442695
    %v191 = vpow.pop %v190
    %v192 = vadd.f32 %v191, 1.0
    %v193 = vrcp.pop %v192
    %v194 = vmul.f32 1.0, %v193
    %v195 = vtanh.pop %v145
    %v196 = vxor.u32 %v184, 2147483648
    %v197 = vmul.f32 %v196, 1.442695
    %v198 = vpow.pop %v197
    %v199 = vadd.f32 %v198, 1.0
    %v200 = vrcp.pop %v199
    %v201 = vmul.f32 1.0, %v200
    %v202 = vmul.f32 %v194, %v195
    %v203 = vtanh.pop %v202
    %v204 = vmul.f32 %v201, %v203
    %v205 = vld [vmem:[#allocation4] sm:$0xff]
    %v206 = vld [vmem:[#allocation4 + $0x8] sm:$0xf]
    %v207 = vld [vmem:[#allocation4 + $0xc] sm:$0xff]
    %v208 = vld [vmem:[#allocation4 + $0x14] sm:$0xf]
    %v209 = vld [vmem:[#allocation4 + $0x18] sm:$0xff]
    %v210 = vld [vmem:[#allocation4 + $0x20] sm:$0xf]
    %v211 = vld [vmem:[#allocation4 + $0x24] sm:$0xff]
    %v212 = vld [vmem:[#allocation4 + $0x2c] sm:$0xf]
    %v213 = vld [vmem:[#allocation4 + $0x30] sm:$0xff]
    %v214 = vld [vmem:[#allocation4 + $0x38] sm:$0xf]
    %v215 = vld [vmem:[#allocation4 + $0x3c] sm:$0xff]
    %v216 = vld [vmem:[#allocation4 + $0x44] sm:$0xf]
    %v217 = vld [vmem:[#allocation4 + $0x48] sm:$0xff]
    %v218 = vld [vmem:[#allocation4 + $0x50] sm:$0xf]
    %v219 = vld [vmem:[#allocation4 + $0x54] sm:$0xff]
    %v220 = vld [vmem:[#allocation4 + $0x5c] sm:$0xf]
    %v221 = vld [vmem:[#allocation4 + $0x60] sm:$0xff]
    %v222 = vld [vmem:[#allocation4 + $0x68] sm:$0xf]
    %v223 = vld [vmem:[#allocation4 + $0x6c] sm:$0xff]
    %v224 = vld [vmem:[#allocation4 + $0x74] sm:$0xf]
    %v225 = vld [vmem:[#allocation4 + $0x78] sm:$0xff]
    %v226 = vld [vmem:[#allocation4 + $0x80] sm:$0xf]
    %v227 = vld [vmem:[#allocation4 + $0x84] sm:$0xff]
    %v228 = vld [vmem:[#allocation4 + $0x8c] sm:$0xf]
    %v229 = vld [vmem:[#allocation4 + $0x90] sm:$0xff]
    %v230 = vld [vmem:[#allocation4 + $0x98] sm:$0xf]
    %v231 = vld [vmem:[#allocation4 + $0x9c] sm:$0xff]
    %v232 = vld [vmem:[#allocation4 + $0xa4] sm:$0xf]
    %v233 = vld [vmem:[#allocation4 + $0xa8] sm:$0xff]
    %v234 = vld [vmem:[#allocation4 + $0xb0] sm:$0xf]
    %v235 = vld [vmem:[#allocation4 + $0xb4] sm:$0xff]
    %v236 = vld [vmem:[#allocation4 + $0xbc] sm:$0xf]
    %s237 = scalar_lea.vmem %s3, 3
    %v238 = vld [vmem:[%s237] sm:$0x7]
    %v239 = vpack.c.bf16 %v204, %v204
    %v241 = vlaneseq
    %v242 = vshrl.u32 %v241, 7
    %v243 = vsub.s32 0, %v242
    %v244 = vrot.slane %v238, %v243
    %v245 = vlaneseq
    %v246 = vshrl.u32 %v245, 7
    %v247 = vsub.s32 1, %v246
    %v248 = vrot.slane %v238, %v247
    %v249 = vlaneseq
    %v250 = vshrl.u32 %v249, 7
    %v251 = vsub.s32 2, %v250
    %v252 = vrot.slane %v238, %v251
    %v288 = vunpack.c.l.b16 %v205
    %v289 = vunpack.c.h.b16 %v205
    %v290 = vunpack.c.l.b16 %v206
    %v291 = vunpack.c.l.b16 %v207
    %v292 = vunpack.c.h.b16 %v207
    %v293 = vunpack.c.l.b16 %v208
    %v294 = vunpack.c.l.b16 %v209
    %v295 = vunpack.c.h.b16 %v209
    %v296 = vunpack.c.l.b16 %v210
    %v297 = vunpack.c.l.b16 %v211
    %v298 = vunpack.c.h.b16 %v211
    %v299 = vunpack.c.l.b16 %v212
    %v300 = vunpack.c.l.b16 %v213
    %v301 = vunpack.c.h.b16 %v213
    %v302 = vunpack.c.l.b16 %v214
    %v303 = vunpack.c.l.b16 %v215
    %v304 = vunpack.c.h.b16 %v215
    %v305 = vunpack.c.l.b16 %v216
    %v306 = vunpack.c.l.b16 %v217
    %v307 = vunpack.c.h.b16 %v217
    %v308 = vunpack.c.l.b16 %v218
    %v309 = vunpack.c.l.b16 %v219
    %v310 = vunpack.c.h.b16 %v219
    %v311 = vunpack.c.l.b16 %v220
    %v312 = vunpack.c.l.b16 %v221
    %v313 = vunpack.c.h.b16 %v221
    %v314 = vunpack.c.l.b16 %v222
    %v315 = vunpack.c.l.b16 %v223
    %v316 = vunpack.c.h.b16 %v223
    %v317 = vunpack.c.l.b16 %v224
    %v318 = vunpack.c.l.b16 %v225
    %v319 = vunpack.c.h.b16 %v225
    %v320 = vunpack.c.l.b16 %v226
    %v321 = vunpack.c.l.b16 %v227
    %v322 = vunpack.c.h.b16 %v227
    %v323 = vunpack.c.l.b16 %v228
    %v324 = vunpack.c.l.b16 %v229
    %v325 = vunpack.c.h.b16 %v229
    %v326 = vunpack.c.l.b16 %v230
    %v327 = vunpack.c.l.b16 %v231
    %v328 = vunpack.c.h.b16 %v231
    %v329 = vunpack.c.l.b16 %v232
    %v330 = vunpack.c.l.b16 %v233
    %v331 = vunpack.c.h.b16 %v233
    %v332 = vunpack.c.l.b16 %v234
    %v333 = vunpack.c.l.b16 %v235
    %v334 = vunpack.c.h.b16 %v235
    %v335 = vunpack.c.l.b16 %v236
    %v336 = vpack.c.b16 %v291, %v288
    %v337 = vpack.c.b16 %v292, %v289
    %v338 = vpack.c.b16 %v293, %v290
    %v339 = vpack.c.b16 %v297, %v294
    %v340 = vpack.c.b16 %v298, %v295
    %v341 = vpack.c.b16 %v299, %v296
    %v342 = vpack.c.b16 %v303, %v300
    %v343 = vpack.c.b16 %v304, %v301
    %v344 = vpack.c.b16 %v305, %v302
    %v345 = vpack.c.b16 %v309, %v306
    %v346 = vpack.c.b16 %v310, %v307
    %v347 = vpack.c.b16 %v311, %v308
    %v348 = vpack.c.b16 %v315, %v312
    %v349 = vpack.c.b16 %v316, %v313
    %v350 = vpack.c.b16 %v317, %v314
    %v351 = vpack.c.b16 %v321, %v318
    %v352 = vpack.c.b16 %v322, %v319
    %v353 = vpack.c.b16 %v323, %v320
    %v354 = vpack.c.b16 %v327, %v324
    %v355 = vpack.c.b16 %v328, %v325
    %v356 = vpack.c.b16 %v329, %v326
    %v357 = vpack.c.b16 %v333, %v330
    %v358 = vpack.c.b16 %v334, %v331
    %v359 = vpack.c.b16 %v335, %v332
    %384 = vmatprep.subr.bf16.mxu0 %v358
    %385 = vmatpush1.bf16.msra.mxu0 %v357
    %386 = vmatprep.subr.bf16.mxu0 %v355
    %387 = vmatpush1.bf16.msra.mxu0 %v354
    %388 = vmatprep.subr.bf16.mxu0 %v352
    %389 = vmatpush1.bf16.msra.mxu0 %v351
    %390 = vmatprep.subr.bf16.mxu0 %v349
    %391 = vmatpush1.bf16.msra.mxu0 %v348
    %392 = vmatprep.subr.bf16.mxu0 %v346
    %393 = vmatpush1.bf16.msra.mxu0 %v345
    %394 = vmatprep.subr.bf16.mxu0 %v343
    %395 = vmatpush1.bf16.msra.mxu0 %v342
    %396 = vmatprep.subr.bf16.mxu0 %v340
    %397 = vmatpush1.bf16.msra.mxu0 %v339
    %398 = vmatprep.subr.bf16.mxu0 %v337
    %399 = vmatpush1.bf16.msra.mxu0 %v336
    %400 = vmatprep.subr.bf16.mxu0 0
    %401 = vmatpush2.bf16.msra.mxu0 0
    %402 = vmatprep.subr.bf16.mxu0 0
    %403 = vmatpush2.bf16.msra.mxu0 0
    %404 = vmatprep.subr.bf16.mxu0 0
    %405 = vmatpush2.bf16.msra.mxu0 0
    %406 = vmatprep.subr.bf16.mxu0 0
    %407 = vmatpush2.bf16.msra.mxu0 0
    %408 = vmatprep.subr.bf16.mxu0 0
    %409 = vmatpush2.bf16.msra.mxu0 0
    %410 = vmatprep.subr.bf16.mxu0 0
    %411 = vmatpush2.bf16.msra.mxu0 0
    %412 = vmatprep.subr.bf16.mxu0 0
    %413 = vmatpush2.bf16.msra.mxu0 0
    %414 = vmatprep.subr.bf16.mxu0 0
    %415 = vmatpush2.bf16.msra.mxu0 0
    %416 = vmatprep.mubr.bf16.mxu0 0
    %417 = vmatmul.mubr.bf16.gmra.mxu0 %v239
    %v418 = vpop.f32.mrf.mxu0
    %v419 = vadd.f32 %v244, %v418
    %v420 = vpop.f32.mrf.mxu0
    %v421 = vadd.f32 %v248, %v420
    %v422 = vpop.f32.mrf.mxu0
    %v423 = vpop.f32.mrf.mxu0
    %424 = vdwg.mxu0
    %425 = vmatprep.subr.bf16.mxu0 0
    %426 = vmatpush1.bf16.msra.mxu0 %v359
    %427 = vmatprep.subr.bf16.mxu0 0
    %428 = vmatpush1.bf16.msra.mxu0 %v356
    %429 = vmatprep.subr.bf16.mxu0 0
    %430 = vmatpush1.bf16.msra.mxu0 %v353
    %431 = vmatprep.subr.bf16.mxu0 0
    %432 = vmatpush1.bf16.msra.mxu0 %v350
    %433 = vmatprep.subr.bf16.mxu0 0
    %434 = vmatpush1.bf16.msra.mxu0 %v347
    %435 = vmatprep.subr.bf16.mxu0 0
    %436 = vmatpush1.bf16.msra.mxu0 %v344
    %437 = vmatprep.subr.bf16.mxu0 0
    %438 = vmatpush1.bf16.msra.mxu0 %v341
    %439 = vmatprep.subr.bf16.mxu0 0
    %440 = vmatpush1.bf16.msra.mxu0 %v338
    %441 = vmatprep.subr.bf16.mxu0 0
    %442 = vmatpush2.bf16.msra.mxu0 0
    %443 = vmatprep.subr.bf16.mxu0 0
    %444 = vmatpush2.bf16.msra.mxu0 0
    %445 = vmatprep.subr.bf16.mxu0 0
    %446 = vmatpush2.bf16.msra.mxu0 0
    %447 = vmatprep.subr.bf16.mxu0 0
    %448 = vmatpush2.bf16.msra.mxu0 0
    %449 = vmatprep.subr.bf16.mxu0 0
    %450 = vmatpush2.bf16.msra.mxu0 0
    %451 = vmatprep.subr.bf16.mxu0 0
    %452 = vmatpush2.bf16.msra.mxu0 0
    %453 = vmatprep.subr.bf16.mxu0 0
    %454 = vmatpush2.bf16.msra.mxu0 0
    %455 = vmatprep.subr.bf16.mxu0 0
    %456 = vmatpush2.bf16.msra.mxu0 0
    %457 = vmatprep.mubr.bf16.mxu0 0
    %458 = vmatmul.mubr.bf16.gmra.mxu0 %v239
    %v459 = vpop.f32.mrf.mxu0
    %v460 = vadd.f32 %v252, %v459
    %v461 = vpop.f32.mrf.mxu0
    %v462 = vpop.f32.mrf.mxu0
    %v463 = vpop.f32.mrf.mxu0
    %464 = vdwg.mxu0
    %v465 = vxor.u32 %v419, 2147483648
    %v466 = vmul.f32 %v465, 1.442695
    %v467 = vpow.pop %v466
    %v468 = vadd.f32 %v467, 1.0
    %v469 = vrcp.pop %v468
    %v470 = vmul.f32 1.0, %v469
    %v471 = vtanh.pop %v421
    %v472 = vxor.u32 %v460, 2147483648
    %v473 = vmul.f32 %v472, 1.442695
    %v474 = vpow.pop %v473
    %v475 = vadd.f32 %v474, 1.0
    %v476 = vrcp.pop %v475
    %v477 = vmul.f32 1.0, %v476
    %v478 = vmul.f32 %v470, %v471
    %v479 = vtanh.pop %v478
    %v480 = vmul.f32 %v477, %v479
    %v481 = vpack.c.bf16 %v480, %v480
    %v482 = vld [vmem:[#allocation6] sm:$0xf]
    %v483 = vld [vmem:[#allocation6 + $0x4] sm:$0xf]
    %v484 = vld [vmem:[#allocation6 + $0x8] sm:$0xf]
    %v485 = vld [vmem:[#allocation6 + $0xc] sm:$0xf]
    %v486 = vld [vmem:[#allocation6 + $0x10] sm:$0xf]
    %v487 = vld [vmem:[#allocation6 + $0x14] sm:$0xf]
    %v488 = vld [vmem:[#allocation6 + $0x18] sm:$0xf]
    %v489 = vld [vmem:[#allocation6 + $0x1c] sm:$0xf]
    %v490 = vld [vmem:[#allocation6 + $0x20] sm:$0xf]
    %v491 = vld [vmem:[#allocation6 + $0x24] sm:$0xf]
    %v492 = vld [vmem:[#allocation6 + $0x28] sm:$0xf]
    %v493 = vld [vmem:[#allocation6 + $0x2c] sm:$0xf]
    %v494 = vld [vmem:[#allocation6 + $0x30] sm:$0xf]
    %v495 = vld [vmem:[#allocation6 + $0x34] sm:$0xf]
    %v496 = vld [vmem:[#allocation6 + $0x38] sm:$0xf]
    %v497 = vld [vmem:[#allocation6 + $0x3c] sm:$0xf]
    %v498 = vld [vmem:[%s5] sm:$0x1]
    %v500 = vlaneseq
    %v501 = vshrl.u32 %v500, 7
    %v502 = vsub.s32 0, %v501
    %v503 = vrot.slane %v498, %v502
    %v521 = vunpack.c.l.b16 %v482
    %v522 = vunpack.c.l.b16 %v483
    %v523 = vunpack.c.l.b16 %v484
    %v524 = vunpack.c.l.b16 %v485
    %v525 = vunpack.c.l.b16 %v486
    %v526 = vunpack.c.l.b16 %v487
    %v527 = vunpack.c.l.b16 %v488
    %v528 = vunpack.c.l.b16 %v489
    %v529 = vunpack.c.l.b16 %v490
    %v530 = vunpack.c.l.b16 %v491
    %v531 = vunpack.c.l.b16 %v492
    %v532 = vunpack.c.l.b16 %v493
    %v533 = vunpack.c.l.b16 %v494
    %v534 = vunpack.c.l.b16 %v495
    %v535 = vunpack.c.l.b16 %v496
    %v536 = vunpack.c.l.b16 %v497
    %v537 = vpack.c.b16 %v522, %v521
    %v538 = vpack.c.b16 %v524, %v523
    %v539 = vpack.c.b16 %v526, %v525
    %v540 = vpack.c.b16 %v528, %v527
    %v541 = vpack.c.b16 %v530, %v529
    %v542 = vpack.c.b16 %v532, %v531
    %v543 = vpack.c.b16 %v534, %v533
    %v544 = vpack.c.b16 %v536, %v535
    %553 = vmatprep.subr.bf16.mxu0 0
    %554 = vmatpush1.bf16.msra.mxu0 %v544
    %555 = vmatprep.subr.bf16.mxu0 0
    %556 = vmatpush1.bf16.msra.mxu0 %v543
    %557 = vmatprep.subr.bf16.mxu0 0
    %558 = vmatpush1.bf16.msra.mxu0 %v542
    %559 = vmatprep.subr.bf16.mxu0 0
    %560 = vmatpush1.bf16.msra.mxu0 %v541
    %561 = vmatprep.subr.bf16.mxu0 0
    %562 = vmatpush1.bf16.msra.mxu0 %v540
    %563 = vmatprep.subr.bf16.mxu0 0
    %564 = vmatpush1.bf16.msra.mxu0 %v539
    %565 = vmatprep.subr.bf16.mxu0 0
    %566 = vmatpush1.bf16.msra.mxu0 %v538
    %567 = vmatprep.subr.bf16.mxu0 0
    %568 = vmatpush1.bf16.msra.mxu0 %v537
    %569 = vmatprep.subr.bf16.mxu0 0
    %570 = vmatpush2.bf16.msra.mxu0 0
    %571 = vmatprep.subr.bf16.mxu0 0
    %572 = vmatpush2.bf16.msra.mxu0 0
    %573 = vmatprep.subr.bf16.mxu0 0
    %574 = vmatpush2.bf16.msra.mxu0 0
    %575 = vmatprep.subr.bf16.mxu0 0
    %576 = vmatpush2.bf16.msra.mxu0 0
    %577 = vmatprep.subr.bf16.mxu0 0
    %578 = vmatpush2.bf16.msra.mxu0 0
    %579 = vmatprep.subr.bf16.mxu0 0
    %580 = vmatpush2.bf16.msra.mxu0 0
    %581 = vmatprep.subr.bf16.mxu0 0
    %582 = vmatpush2.bf16.msra.mxu0 0
    %583 = vmatprep.subr.bf16.mxu0 0
    %584 = vmatpush2.bf16.msra.mxu0 0
    %585 = vmatprep.mubr.bf16.mxu0 0
    %586 = vmatmul.mubr.bf16.gmra.mxu0 %v481
    %v587 = vpop.f32.mrf.mxu0
    %v588 = vadd.f32 %v503, %v587
    %v589 = vpop.f32.mrf.mxu0
    %v590 = vpop.f32.mrf.mxu0
    %v591 = vpop.f32.mrf.mxu0
    %592 = vdwg.mxu0
    %593 = vst [vmem:[%s6] sm:$0xff] %v588
    // Predicated region
    $region38: #{lstm_forward.1} parent=1 // pred_check
      _
    $region39: #{lstm_forward.1} parent=1 // pred_check_branch
      %595 = sbr.rel (0) target = $region41
    $region40: #{lstm_forward.1} parent=1 // pred_region
      _
    $region41: #{lstm_forward.1} parent=1 // pred_fallthru
      _
    // Predicated region
    $region42: #{lstm_forward.1} parent=1 // pred_check
      _
    $region43: #{lstm_forward.1} parent=1 // pred_check_branch
      %597 = sbr.rel (0) target = $region45
    $region44: #{lstm_forward.1} parent=1 // pred_region
      _
    $region45: #{lstm_forward.1} parent=1 // pred_fallthru
      _
    %598 = vsyncpa [#allocation3], 1
    %599 = vsyncpa [#allocation5], 1

</llo_original>
